<compile_context>
chip_gen: v7x
topology: tpu7x:2x2x1
jax: 0.10.0
libtpu: 0.0.40
codegen_flags: <defaults>
</compile_context>

<pallas_src>
import functools

import jax
import jax.numpy as jnp
from jax.experimental import pallas as pl
from jax.experimental.pallas import tpu as pltpu


# ----------------------------- shared helpers -------------------------------


def _pool3x3_flat(cleared, H, W):
    """3x3, stride-1, pad-1 (-inf) max pool on a row-flattened (n, H*W) map.

    Separable: horizontal max via lane rolls, then vertical max via row-sized
    rolls.  pltpu.roll requires non-negative shifts, so "shift by -k" is the
    circular "shift by HW - k"; wrap-around / out-of-image contributions are
    masked to -inf with boundary masks built once from a single iota.
    """
    HW = H * W
    neg = jnp.array(-jnp.inf, dtype=cleared.dtype)
    idx = jax.lax.broadcasted_iota(jnp.int32, (1, HW), 1)
    col = idx % W
    has_l = col > 0                  # (h, w-1) exists
    has_r = col < (W - 1)            # (h, w+1) exists
    has_u = idx >= W                 # (h-1, w) exists
    has_d = idx < (H - 1) * W        # (h+1, w) exists

    left = jnp.where(has_l, pltpu.roll(cleared, shift=1, axis=1), neg)
    right = jnp.where(has_r, pltpu.roll(cleared, shift=HW - 1, axis=1), neg)
    rowmax = jnp.maximum(cleared, jnp.maximum(left, right))
    up = jnp.where(has_u, pltpu.roll(rowmax, shift=W, axis=1), neg)
    down = jnp.where(has_d, pltpu.roll(rowmax, shift=HW - W, axis=1), neg)
    return jnp.maximum(rowmax, jnp.maximum(up, down))


# ----------------------------- fused kernel ---------------------------------


def _fused_kernel(x_ref, o_ref, *, classes, H, W):
    """Read-once / write-once NMS on a (bt, C, HW) batch-group slab."""
    x = x_ref[...]                                              # (bt, C, HW)
    neg = jnp.array(-jnp.inf, dtype=x.dtype)
    # Max over the class channels only; box channels are masked to -inf
    # (cheaper and layout-safer than a non-8-aligned sublane slice).
    ch = jax.lax.broadcasted_iota(jnp.int32, x.shape, 1)
    cleared = jnp.max(jnp.where(ch < classes, x, neg), axis=1)  # (bt, HW)
    maxes = _pool3x3_flat(cleared, H, W)
    keep = (maxes == cleared).astype(x.dtype)                   # 0/1 (bt, HW)
    o_ref[...] = x * keep[:, None, :]


# --------------------------- two-pass fallback -------------------------------


def _mask_kernel(x_ref, m_ref, acc_ref, *, classes, ct, H, W):
    """Pass 1: running channel max over class-channel tiles -> pool -> mask."""
    c = pl.program_id(1)
    nc = pl.num_programs(1)
    x = x_ref[...]                                              # (bt, ct, HW)

    @pl.when(c == 0)
    def _init():
        acc_ref[...] = jnp.full(acc_ref.shape, -jnp.inf, acc_ref.dtype)

    if classes % ct == 0:
        # Every tile holds class channels only: plain unmasked max.
        acc_ref[...] = jnp.maximum(acc_ref[...], jnp.max(x, axis=1))
    else:
        @pl.when(c < nc - 1)
        def _full_tile():
            acc_ref[...] = jnp.maximum(acc_ref[...], jnp.max(x, axis=1))

        @pl.when(c == nc - 1)
        def _straddling_tile():
            # Only the last tile crosses `classes`; mask box / OOB channels.
            neg = jnp.array(-jnp.inf, dtype=x.dtype)
            ch = c * ct + jax.lax.broadcasted_iota(jnp.int32, x.shape, 1)
            xm = jnp.where(ch < classes, x, neg)
            acc_ref[...] = jnp.maximum(acc_ref[...], jnp.max(xm, axis=1))

    @pl.when(c == nc - 1)
    def _finalize():
        cleared = acc_ref[...]                                  # (bt, HW)
        maxes = _pool3x3_flat(cleared, H, W)
        keep = (maxes == cleared).astype(m_ref.dtype)
        m_ref[...] = keep.reshape(m_ref.shape)                  # 2-D or 3-D


def _apply_kernel(x_ref, m_ref, o_ref):
    """Pass 2: out = points * mask (mask already 0/1 in the input dtype)."""
    m = m_ref[...]
    if m.ndim == 2:                       # lane/sublane-dense (bt, st) layout
        m = m[:, None, :]
    o_ref[...] = x_ref[...] * m


# ------------------------------ tiling logic ---------------------------------


def _round_up(n, m):
    return ((n + m - 1) // m) * m


def _derive_budgets(block_budget_bytes, vmem_limit_bytes):
    """Per-generation VMEM budgets (v7x: 64 MiB VMEM; v5e/v6e: 128 MiB)."""
    if block_budget_bytes is not None and vmem_limit_bytes is not None:
        return block_budget_bytes, vmem_limit_bytes
    try:
        phys = getattr(pltpu.get_tpu_info(), "vmem_capacity_bytes", None)
    except Exception:
        phys = None
    if not phys:
        phys = 64 * 1024 * 1024           # conservative (v7x per-TensorCore)
    if vmem_limit_bytes is None:
        vmem_limit_bytes = min((phys * 3) // 4, 112 * 1024 * 1024)
    if block_budget_bytes is None:
        # in + out double-buffered  ->  ~4x one block must fit the limit.
        block_budget_bytes = vmem_limit_bytes // 4
    return block_budget_bytes, vmem_limit_bytes


def _pick_mask_channel_tile(classes, C, HW, itemsize, budget):
    """Channel tile for fallback pass 1: class channels only, 8-aligned."""
    full = min(C, _round_up(classes, 8))
    if full * HW * itemsize <= budget:
        return full
    ct = (budget // (HW * itemsize)) // 8 * 8
    ct = min(full, max(8, ct))
    if ct % 8 != 0:                       # only possible when full == C < 8
        ct = full
    return ct


def _fit_apply_tiles(C, HW, itemsize, budget):
    """(channel_tile, spatial_tile) for fallback pass 2."""
    if C * HW * itemsize <= budget:
        return C, HW
    st_floor = min(HW, 512)               # >=512 lanes ~ >=85% of HBM roofline
    st = (budget // (C * itemsize)) // 128 * 128
    if st >= st_floor:
        return C, min(st, HW)
    ct = (budget // (st_floor * itemsize)) // 8 * 8
    ct = min(C, max(8, ct))
    return ct, st_floor


# -------------------------------- wrapper ------------------------------------


def points_non_max_suppression(points, *, block_budget_bytes=None,
                               vmem_limit_bytes=None):
    """points: float array (B, C, H, W) with C = num_classes + 4 (NCHW)."""
    B, C, H, W = points.shape
    classes = C - 4
    assert classes >= 1, "need at least one class channel"
    HW = H * W
    dt = points.dtype
    itemsize = jnp.dtype(dt).itemsize
    block_budget_bytes, vmem_limit_bytes = _derive_budgets(
        block_budget_bytes, vmem_limit_bytes)

    # Lane-dense flattened spatial layout (free reshape of contiguous dims).
    x = points.reshape(B, C, HW)
    per_batch = C * HW * itemsize

    # Batch-group size: as big as the budget allows, but always expose >= 2
    # blocks along the "parallel" batch axis when B >= 2 so both v7x
    # TensorCores get work (one extra ~0.35 us grid step on 1-TC chips).
    bt = max(1, min(B, block_budget_bytes // max(per_batch, 1)))
    if B >= 2:
        bt = min(bt, pl.cdiv(B, 2))

    # ------------------ fused single-pass kernel (primary) ------------------
    if per_batch <= block_budget_bytes:
        out_flat = pl.pallas_call(
            functools.partial(_fused_kernel, classes=classes, H=H, W=W),
            out_shape=jax.ShapeDtypeStruct((B, C, HW), dt),
            grid_spec=pltpu.PrefetchScalarGridSpec(
                num_scalar_prefetch=0,
                grid=(pl.cdiv(B, bt),),
                in_specs=[pl.BlockSpec((bt, C, HW), lambda b: (b, 0, 0))],
                out_specs=pl.BlockSpec((bt, C, HW), lambda b: (b, 0, 0))),
            compiler_params=pltpu.CompilerParams(
                dimension_semantics=("parallel",),
                vmem_limit_bytes=vmem_limit_bytes),
            cost_estimate=pl.CostEstimate(
                flops=B * HW * (2 * C + 12), transcendentals=0,
                bytes_accessed=2 * B * C * HW * itemsize),
        )(x)
        return out_flat.reshape(B, C, H, W)

    # -------- fallback: huge C*HW -> two passes (mask, then multiply) --------
    # TODO(synk): a single batch row whose spatial map alone exceeds VMEM would
    # additionally need H-tiling with a 1-row halo in pass 1; not needed for
    # realistic point-head shapes.
    ct1 = _pick_mask_channel_tile(classes, C, HW, itemsize, block_budget_bytes)
    nct = pl.cdiv(classes, ct1)            # box channels are never DMA'd
    mask_2d = (bt == B) or (bt % 8 == 0)   # sublane/lane-dense mask layout
    if mask_2d:
        mask_shape = (B, HW)
        m_out_spec = pl.BlockSpec((bt, HW), lambda b, c: (b, 0))
    else:
        mask_shape = (B, 1, HW)
        m_out_spec = pl.BlockSpec((bt, 1, HW), lambda b, c: (b, 0, 0))

    mask = pl.pallas_call(
        functools.partial(_mask_kernel, classes=classes, ct=ct1, H=H, W=W),
        out_shape=jax.ShapeDtypeStruct(mask_shape, dt),
        grid_spec=pltpu.PrefetchScalarGridSpec(
            num_scalar_prefetch=0,
            grid=(pl.cdiv(B, bt), nct),
            in_specs=[pl.BlockSpec((bt, ct1, HW), lambda b, c: (b, c, 0))],
            out_specs=m_out_spec,
            scratch_shapes=[pltpu.VMEM((bt, HW), dt)]),
        compiler_params=pltpu.CompilerParams(
            dimension_semantics=("parallel", "arbitrary"),
            vmem_limit_bytes=vmem_limit_bytes),
        cost_estimate=pl.CostEstimate(
            flops=B * HW * (classes + 12), transcendentals=0,
            bytes_accessed=B * (nct * ct1 + 1) * HW * itemsize),
    )(x)

    ct2, st = _fit_apply_tiles(C, HW, itemsize, block_budget_bytes)
    if mask_2d:
        m_in_spec = pl.BlockSpec((bt, st), lambda b, s, c: (b, s))
    else:
        m_in_spec = pl.BlockSpec((bt, 1, st), lambda b, s, c: (b, 0, s))
    # Channel axis innermost: the mask block index is constant across the
    # consecutive channel steps, so Pallas can skip its re-DMA.
    grid2 = (pl.cdiv(B, bt), pl.cdiv(HW, st), pl.cdiv(C, ct2))
    out_flat = pl.pallas_call(
        _apply_kernel,
        out_shape=jax.ShapeDtypeStruct((B, C, HW), dt),
        grid_spec=pltpu.PrefetchScalarGridSpec(
            num_scalar_prefetch=0,
            grid=grid2,
            in_specs=[pl.BlockSpec((bt, ct2, st), lambda b, s, c: (b, c, s)),
                      m_in_spec],
            out_specs=pl.BlockSpec((bt, ct2, st), lambda b, s, c: (b, c, s))),
        compiler_params=pltpu.CompilerParams(
            dimension_semantics=("parallel", "parallel", "parallel"),
            vmem_limit_bytes=vmem_limit_bytes),
        cost_estimate=pl.CostEstimate(
            flops=B * C * HW, transcendentals=0,
            bytes_accessed=(2 * C + 1) * B * HW * itemsize),
    )(x, mask)
    return out_flat.reshape(B, C, H, W)


# ------------------------------- validation ----------------------------------


def _reference_nms(points):
    """Pure-JAX reference mirroring the PyTorch forward."""
    B, C, H, W = points.shape
    classes = C - 4
    cleared = jnp.max(points[:, :classes], axis=1)                    # (B,H,W)
    padded = jnp.pad(cleared, ((0, 0), (1, 1), (1, 1)),
                     constant_values=-jnp.inf)
    windows = jnp.stack(
        [padded[:, dy:dy + H, dx:dx + W] for dy in range(3) for dx in range(3)],
        axis=0)
    maxes = jnp.max(windows, axis=0)                                  # (B,H,W)
    eq = (maxes == cleared)[:, None, :, :]
    return points * eq.astype(points.dtype)


if __name__ == "__main__":
    # Test 1 (primary fused path): batch=2, num_classes=4 -> C=8, 16x16.
    key = jax.random.PRNGKey(0)
    B, num_classes, H, W = 2, 4, 16, 16
    C = num_classes + 4
    points = jax.random.normal(key, (B, C, H, W), dtype=jnp.float32)

    out = jax.block_until_ready(points_non_max_suppression(points))
    ref = _reference_nms(points)
    assert out.shape == points.shape and out.dtype == points.dtype
    assert jnp.allclose(out, ref), "fused Pallas NMS does not match reference"

    # Test 2 (two-pass fallback): tiny artificial block budget forces channel
    # tiling in pass 1 and (b, s, c) spatial/channel tiling in pass 2.
    points2 = jax.random.normal(jax.random.PRNGKey(1), (2, 16, 32, 32),
                                dtype=jnp.float32)
    out2 = jax.block_until_ready(
        points_non_max_suppression(points2, block_budget_bytes=16 * 1024))
    ref2 = _reference_nms(points2)
    assert jnp.allclose(out2, ref2), "fallback Pallas NMS does not match reference"

    print("KERNEL_OK")
</pallas_src>

<mosaic_0001>
module attributes {stable_mosaic.version = 11 : i64} {
  func.func @_fused_kernel(%arg0: i32, %arg1: memref<1x8x256xf32, #tpu.memory_space<vmem>>, %arg2: memref<1x8x256xf32, #tpu.memory_space<vmem>>) attributes {dimension_semantics = [#tpu.dimension_semantics<parallel>], iteration_bounds = array<i64: 2>, scalar_prefetch = 0 : i64, scratch_operands = 0 : i64, tpu.core_type = #tpu.core_type<tc>, window_params = [{transform_indices = @transform_0, window_bounds = array<i64: 1, 8, 256>}, {transform_indices = @transform_1, window_bounds = array<i64: 1, 8, 256>}]} {
    %c0 = arith.constant 0 : index
    %c0_0 = arith.constant 0 : index
    %c0_1 = arith.constant 0 : index
    %0 = vector.load %arg1[%c0, %c0_0, %c0_1] : memref<1x8x256xf32, #tpu.memory_space<vmem>>, vector<1x8x256xf32>
    %1 = tpu.iota {dimensions = array<i32: 1>} : vector<1x8x256xi32>
    %c4_i32 = arith.constant 4 : i32
    %2 = vector.broadcast %c4_i32 : i32 to vector<1x8x256xi32>
    %3 = arith.cmpi slt, %1, %2 : vector<1x8x256xi32>
    %cst = arith.constant 0xFF800000 : f32
    %4 = vector.broadcast %cst : f32 to vector<1x8x256xf32>
    %5 = arith.select %3, %0, %4 : vector<1x8x256xi1>, vector<1x8x256xf32>
    %cst_2 = arith.constant dense<0xFF800000> : vector<1x256xf32>
    %6 = vector.multi_reduction <maximumf>, %5, %cst_2 [1] : vector<1x8x256xf32> to vector<1x256xf32>
    %7 = tpu.iota {dimensions = array<i32: 1>} : vector<1x256xi32>
    %c16_i32 = arith.constant 16 : i32
    %c0_i32 = arith.constant 0 : i32
    %8 = arith.cmpi eq, %c16_i32, %c0_i32 : i32
    %c1_i32 = arith.constant 1 : i32
    %9 = arith.select %8, %c1_i32, %c16_i32 : i32
    %10 = vector.broadcast %9 : i32 to vector<1x256xi32>
    %11 = arith.remsi %7, %10 : vector<1x256xi32>
    %c0_i32_3 = arith.constant 0 : i32
    %12 = vector.broadcast %c0_i32_3 : i32 to vector<1x256xi32>
    %13 = arith.cmpi ne, %11, %12 : vector<1x256xi32>
    %c0_i32_4 = arith.constant 0 : i32
    %14 = vector.broadcast %c0_i32_4 : i32 to vector<1x256xi32>
    %15 = arith.cmpi slt, %11, %14 : vector<1x256xi32>
    %c0_i32_5 = arith.constant 0 : i32
    %16 = arith.cmpi slt, %9, %c0_i32_5 : i32
    %17 = vector.broadcast %16 : i1 to vector<1x256xi1>
    %18 = vector.broadcast %17 : vector<1x256xi1> to vector<1x256xi1>
    %19 = arith.xori %15, %18 : vector<1x256xi1>
    %20 = arith.andi %19, %13 : vector<1x256xi1>
    %21 = vector.broadcast %9 : i32 to vector<1x256xi32>
    %22 = arith.addi %11, %21 : vector<1x256xi32>
    %23 = arith.select %20, %22, %11 : vector<1x256xi1>, vector<1x256xi32>
    %c0_i32_6 = arith.constant 0 : i32
    %24 = vector.broadcast %c0_i32_6 : i32 to vector<1x256xi32>
    %25 = arith.cmpi sgt, %23, %24 : vector<1x256xi32>
    %c15_i32 = arith.constant 15 : i32
    %26 = vector.broadcast %c15_i32 : i32 to vector<1x256xi32>
    %27 = arith.cmpi slt, %23, %26 : vector<1x256xi32>
    %c16_i32_7 = arith.constant 16 : i32
    %28 = vector.broadcast %c16_i32_7 : i32 to vector<1x256xi32>
    %29 = arith.cmpi sge, %7, %28 : vector<1x256xi32>
    %c240_i32 = arith.constant 240 : i32
    %30 = vector.broadcast %c240_i32 : i32 to vector<1x256xi32>
    %31 = arith.cmpi slt, %7, %30 : vector<1x256xi32>
    %c1_i32_8 = arith.constant 1 : i32
    %32 = tpu.dynamic_rotate %6 by %c1_i32_8 dim 1 : vector<1x256xf32>, i32 -> vector<1x256xf32>
    %cst_9 = arith.constant 0xFF800000 : f32
    %33 = vector.broadcast %cst_9 : f32 to vector<1x256xf32>
    %34 = arith.select %25, %32, %33 : vector<1x256xi1>, vector<1x256xf32>
    %c255_i32 = arith.constant 255 : i32
    %35 = tpu.dynamic_rotate %6 by %c255_i32 dim 1 : vector<1x256xf32>, i32 -> vector<1x256xf32>
    %cst_10 = arith.constant 0xFF800000 : f32
    %36 = vector.broadcast %cst_10 : f32 to vector<1x256xf32>
    %37 = arith.select %27, %35, %36 : vector<1x256xi1>, vector<1x256xf32>
    %38 = arith.maximumf %34, %37 : vector<1x256xf32>
    %39 = arith.maximumf %6, %38 : vector<1x256xf32>
    %c16_i32_11 = arith.constant 16 : i32
    %40 = tpu.dynamic_rotate %39 by %c16_i32_11 dim 1 : vector<1x256xf32>, i32 -> vector<1x256xf32>
    %cst_12 = arith.constant 0xFF800000 : f32
    %41 = vector.broadcast %cst_12 : f32 to vector<1x256xf32>
    %42 = arith.select %29, %40, %41 : vector<1x256xi1>, vector<1x256xf32>
    %c240_i32_13 = arith.constant 240 : i32
    %43 = tpu.dynamic_rotate %39 by %c240_i32_13 dim 1 : vector<1x256xf32>, i32 -> vector<1x256xf32>
    %cst_14 = arith.constant 0xFF800000 : f32
    %44 = vector.broadcast %cst_14 : f32 to vector<1x256xf32>
    %45 = arith.select %31, %43, %44 : vector<1x256xi1>, vector<1x256xf32>
    %46 = arith.maximumf %42, %45 : vector<1x256xf32>
    %47 = arith.maximumf %39, %46 : vector<1x256xf32>
    %48 = arith.cmpf oeq, %47, %6 : vector<1x256xf32>
    %49 = arith.extui %48 : vector<1x256xi1> to vector<1x256xi32>
    %50 = arith.sitofp %49 : vector<1x256xi32> to vector<1x256xf32>
    %51 = vector.shape_cast %50 : vector<1x256xf32> to vector<1x1x256xf32>
    %52 = vector.broadcast %51 : vector<1x1x256xf32> to vector<1x8x256xf32>
    %53 = arith.mulf %0, %52 : vector<1x8x256xf32>
    %c0_15 = arith.constant 0 : index
    %c0_16 = arith.constant 0 : index
    %c0_17 = arith.constant 0 : index
    %54 = vector.load %arg2[%c0_15, %c0_16, %c0_17] : memref<1x8x256xf32, #tpu.memory_space<vmem>>, vector<1x8x256xf32>
    tpu.vector_store %arg2[%c0_15, %c0_16, %c0_17], %53 {strides = array<i32>} : memref<1x8x256xf32, #tpu.memory_space<vmem>>, vector<1x8x256xf32>,
    return
  }
  func.func @transform_0(%arg0: i32) -> (i32, i32, i32) {
    %c0_i32 = arith.constant 0 : i32
    %c0_i32_0 = arith.constant 0 : i32
    %c0_i32_1 = arith.constant 0 : i32
    return %arg0, %c0_i32, %c0_i32_0 : i32, i32, i32
  }
  func.func @transform_1(%arg0: i32) -> (i32, i32, i32) {
    %c0_i32 = arith.constant 0 : i32
    %c0_i32_0 = arith.constant 0 : i32
    %c0_i32_1 = arith.constant 0 : i32
    return %arg0, %c0_i32, %c0_i32_0 : i32, i32, i32
  }
}

</mosaic_0001>

<llo_original>
// kernel: tpu_custom_call.1
$region0: #{tpu_custom_call.1}
  #allocation0 [shape = 'u32[]', space=smem, size = 0x4, offset = 0x4, fixed_abs, tag = 'smem constant byte address 0x4 - core index']
  #allocation1 [shape = 'u32[144,128]{1,0:T(1,128)}', space=vmem, size = 0x12000, scoped, tag = 'internal scratch']
  %s0 = inlined_call_operand.hbm [shape: f32[2,8,256], index: 0, kind: input, shape index: {}]
  %s1 = inlined_call_operand.hbm [shape: f32[2,8,256], index: 1, kind: output, shape index: {}]
  %s2 = sld [smem:[#allocation0]]
  $region41: #{tpu_custom_call.1} parent=0
    _
  %s4 = ssub.s32 1, %s2
  %s5 = scalar_select 0, %s4, %s2
  $region1: #{tpu_custom_call.1} parent=0
    #allocation2 [shape = 'u8[16384]{0}', space=vmem, size = 0x4000, scoped, tag = 'input window, operand 0']
    #allocation3 [shape = 's32[2]{0}', space=sflag, size = 0x8, scoped, tag = 'scoped memory for tpu_custom_call.1']
    #allocation4 [shape = 's32[2]{0}', space=sflag, size = 0x8, scoped, tag = 'scoped memory for tpu_custom_call.1']
    #allocation5 [shape = 'u8[16384]{0}', space=vmem, size = 0x4000, scoped, tag = 'output window, operand 0']
    %6 = vsyncpa [#allocation3], 0
    %s7 = scalar_lea.sflag [#allocation3], 1
    %8 = vsyncpa %s7, 0
    %9 = vsyncpa [#allocation4], 0
    %s10 = scalar_lea.sflag [#allocation4], 1
    %11 = vsyncpa %s10, 0
    loop: start=0, step=1, limit=4
    $region2: #{tpu_custom_call.1} parent=1 // loop_pre_header
      _
    $region3: #{tpu_custom_call.1} parent=1 // loop_header
      %s13 = sphi 0, %s17
      %p14 = scmp.ge.s32.totalorder %s13, 4
      %s23 = sphi 0, %s25
      %s26 = sphi 0, %s23
      %s27 = sphi 0, %s26
      %s43 = sphi 0, %s27
      %s49 = sphi 0, %s51
      %s52 = sphi 0, %s49
      %s53 = sphi 0, %s52
      %s69 = sphi 0, %s53
    $region4: #{tpu_custom_call.1} parent=1 // loop_header_branch
      %16 = sbr.rel (%p14) target = $region8
    $region5: #{tpu_custom_call.1} parent=1 // loop_body
      %s18 = ssub.s32 %s13, 1
      %s19 = ssub.s32 %s13, 2
      %s20 = sadd.s32 %s13, 1
      %s21 = ssub.s32 %s13, %s20
      %p22 = scmp.eq.s32.totalorder %s21, 0
      %s24 = sadd.s32 %s23, 1
      %s25 = scalar_select %p22, %s23, %s24
      %p28 = pneg %p22
      %p29 = scmp.eq.s32.totalorder %s13, 1
      %p30 = por %p28, %p29
      %p31 = scmp.ne.s32.totalorder %s23, %s26
      %p32 = scmp.eq.s32.totalorder %s13, 0
      %p33 = por %p31, %p32
      %p34 = scmp.ne.s32.totalorder %s23, %s26
      %p35 = scmp.eq.s32.totalorder %s18, 1
      %p36 = por %p34, %p35
      %p37 = scmp.ne.s32.totalorder %s26, %s27
      %p38 = scmp.eq.s32.totalorder %s18, 0
      %p39 = por %p37, %p38
      %p40 = scmp.ne.s32.totalorder %s26, %s27
      %p41 = scmp.eq.s32.totalorder %s19, 1
      %p42 = por %p40, %p41
      %p44 = scmp.ne.s32.totalorder %s27, %s43
      %p45 = scmp.eq.s32.totalorder %s19, 0
      %p46 = por %p44, %p45
      %s47 = ssub.s32 %s13, %s20
      %p48 = scmp.eq.s32.totalorder %s47, 0
      %s50 = sadd.s32 %s49, 1
      %s51 = scalar_select %p48, %s49, %s50
      %p54 = pneg %p48
      %p55 = scmp.eq.s32.totalorder %s13, 1
      %p56 = por %p54, %p55
      %p57 = scmp.ne.s32.totalorder %s49, %s52
      %p58 = scmp.eq.s32.totalorder %s13, 0
      %p59 = por %p57, %p58
      %p60 = scmp.ne.s32.totalorder %s49, %s52
      %p61 = scmp.eq.s32.totalorder %s18, 1
      %p62 = por %p60, %p61
      %p63 = scmp.ne.s32.totalorder %s52, %s53
      %p64 = scmp.eq.s32.totalorder %s18, 0
      %p65 = por %p63, %p64
      %p66 = scmp.ne.s32.totalorder %s52, %s53
      %p67 = scmp.eq.s32.totalorder %s19, 1
      %p68 = por %p66, %p67
      %p70 = scmp.ne.s32.totalorder %s53, %s69
      %p71 = scmp.eq.s32.totalorder %s19, 0
      %p72 = por %p70, %p71
      %p73 = scmp.le.s32.totalorder 1, %s13
      %p74 = scmp.lt.s32.totalorder %s13, 3
      %p75 = pnand %p73, %p74
      %p76 = pneg %p75
      // Predicated region
      $region9: #{tpu_custom_call.1} parent=5 // pred_check
        _
      $region10: #{tpu_custom_call.1} parent=5 // pred_check_branch
        %78 = sbr.rel (%p75) target = $region12
      $region11: #{tpu_custom_call.1} parent=5 // pred_region
        %s79 = ssub.s32 %s13, 1
      $region12: #{tpu_custom_call.1} parent=5 // pred_fallthru
        _
      %p80 = scmp.lt.s32.totalorder %s13, 2
      // Predicated region
      $region13: #{tpu_custom_call.1} parent=5 // pred_check
        %p81 = pneg %p80
      $region14: #{tpu_custom_call.1} parent=5 // pred_check_branch
        %83 = sbr.rel (%p81) target = $region16
      $region15: #{tpu_custom_call.1} parent=5 // pred_region
        // Predicated region
        $region17: #{tpu_custom_call.1} parent=15 // pred_check
          %p84 = pneg %p33
        $region18: #{tpu_custom_call.1} parent=15 // pred_check_branch
          %86 = sbr.rel (%p84) target = $region20
        $region19: #{tpu_custom_call.1} parent=15 // pred_region
          %s87 = sand.u32 %s23, 1
          %s88 = scalar_lea.sflag [#allocation3], %s87
          %s89 = sand.u32 %s23, 1
          %s90 = smul.addr %s89, 16
          %s91 = scalar_lea.vmem [#allocation2], %s90
          %s93 = ssub.s32 256, 256
          %94 = vsyncadd %s88, %s93
          %s95 = smul.addr %s13, 2
          %s96 = smul.addr %s95, 128
          %s97 = scalar_lea.hbm %s0, %s96
          %s99 = sshll.u32 %s91, 4
          %s100 = int_to_ptr.vmem [resolvable:$true] %s99
          %102 = dma.hbm_to_vmem [thread:$0]  %s97, 256, %s100, %s88
        $region20: #{tpu_custom_call.1} parent=15 // pred_fallthru
          _
      $region16: #{tpu_custom_call.1} parent=5 // pred_fallthru
        _
      %p103 = scmp.le.s32.totalorder 1, %s13
      %p104 = scmp.lt.s32.totalorder %s13, 3
      %p105 = pnand %p103, %p104
      %p106 = pneg %p105
      // Predicated region
      $region21: #{tpu_custom_call.1} parent=5 // pred_check
        _
      $region22: #{tpu_custom_call.1} parent=5 // pred_check_branch
        %108 = sbr.rel (%p105) target = $region24
      $region23: #{tpu_custom_call.1} parent=5 // pred_region
        %s109 = ssub.s32 %s13, 1
        %s110 = sand.u32 %s26, 1
        %s111 = scalar_lea.sflag [#allocation3], %s110
        %s112 = sand.u32 %s26, 1
        %s113 = smul.addr %s112, 16
        %s114 = scalar_lea.vmem [#allocation2], %s113
        // Predicated region
        $region25: #{tpu_custom_call.1} parent=23 // pred_check
          %p115 = pneg %p39
        $region26: #{tpu_custom_call.1} parent=23 // pred_check_branch
          %117 = sbr.rel (%p115) target = $region28
        $region27: #{tpu_custom_call.1} parent=23 // pred_region
          %118 = dma.done %s111, 256
        $region28: #{tpu_custom_call.1} parent=23 // pred_fallthru
          _
        %s119 = sand.u32 %s26, 1
        %s120 = scalar_lea.sflag [#allocation3], %s119
        %s121 = sand.u32 %s26, 1
        %s122 = smul.addr %s121, 16
        %s123 = scalar_lea.vmem [#allocation2], %s122
        %p124 = pneg %p39
        %p125 = pneg %p36
        %p126 = pneg %p65
        %p127 = pneg %p62
        %s128 = sand.u32 %s52, 1
        %s129 = scalar_lea.sflag [#allocation4], %s128
        %s130 = sand.u32 %s52, 1
        %s131 = smul.addr %s130, 16
        %s132 = scalar_lea.vmem [#allocation5], %s131
        %v133 = vld [vmem:[%s114] sm:$0xff]
        %v134 = vld [vmem:[%s114 + $0x8] sm:$0xff]
        %v135 = vlaneseq
        %v136 = vshrl.u32 %v135, 7
        %vm137 = vcmp.lt.s32.totalorder %v136, 4
        %v138 = vsel %vm137, %v133, -inf
        %v139 = vsel %vm137, %v134, -inf
        %v140 = vrot.slane %v138, 4
        %v141 = vmax.f32 %v138, %v140
        %v142 = vrot.slane %v141, 2
        %v143 = vmax.f32 %v141, %v142
        %v144 = vrot.slane %v143, 1
        %v145 = vmax.f32 %v143, %v144
        %v146 = vrot.slane %v139, 4
        %v147 = vmax.f32 %v139, %v146
        %v148 = vrot.slane %v147, 2
        %v149 = vmax.f32 %v147, %v148
        %v150 = vrot.slane %v149, 1
        %v151 = vmax.f32 %v149, %v150
        %v152 = vlaneseq
        %v153 = vand.u32 %v152, 127
        %v154 = vadd.s32 %v153, 128
        %vm155 = vcmp.lt.s32.totalorder %v153, 0
        %v156 = vsub.s32 0, %v153
        %v157 = vsel %vm155, %v156, %v153
        %v158 = vshrl.u32 %v157, 4
        %v159 = vand.u32 %v157, 15
        %v160 = vsub.s32 0, %v159
        %v161 = vsel %vm155, %v160, %v159
        %vm162 = vcmp.lt.s32.totalorder %v154, 0
        %v163 = vsub.s32 0, %v154
        %v164 = vsel %vm162, %v163, %v154
        %v165 = vshrl.u32 %v164, 4
        %v166 = vand.u32 %v164, 15
        %v167 = vsub.s32 0, %v166
        %v168 = vsel %vm162, %v167, %v166
        %vm169 = vcmp.ne.s32.totalorder %v161, 0
        %vm170 = vcmp.ne.s32.totalorder %v168, 0
        %vm171 = vcmp.lt.s32.totalorder %v161, 0
        %vm172 = vcmp.lt.s32.totalorder %v168, 0
        %vm173 = vmand %vm171, %vm169
        %vm174 = vmand %vm172, %vm170
        %v175 = vadd.s32 %v161, 16
        %v176 = vadd.s32 %v168, 16
        %v177 = vsel %vm173, %v175, %v161
        %v178 = vsel %vm174, %v176, %v168
        %vm179 = vcmp.gt.s32.totalorder %v177, 0
        %vm180 = vcmp.gt.s32.totalorder %v178, 0
        %vm181 = vcmp.lt.s32.totalorder %v177, 15
        %vm182 = vcmp.lt.s32.totalorder %v178, 15
        %vm183 = vcmp.ge.s32.totalorder %v153, 16
        %vm184 = vcmp.ge.s32.totalorder %v154, 16
        %vm185 = vcmp.lt.s32.totalorder %v153, 240
        %vm186 = vcmp.lt.s32.totalorder %v154, 240
        %187 = vrot.lane.b32.xlu0 %v145, 1
        %v188 = vpop.permute.xlu0 %187
        %189 = vrot.lane.b32.xlu0 %v151, 1
        %v190 = vpop.permute.xlu0 %189
        %vm191 = vcmp.lt.s32.totalorder %v153, 1
        %v192 = vsel %vm191, %v188, %v190
        %v193 = vsel %vm191, %v190, %v188
        %v194 = vsel %vm179, %v193, -inf
        %v195 = vsel %vm180, %v192, -inf
        %196 = vrot.lane.b32.xlu0 %v145, 127
        %v197 = vpop.permute.xlu0 %196
        %198 = vrot.lane.b32.xlu0 %v151, 127
        %v199 = vpop.permute.xlu0 %198
        %vm200 = vcmp.lt.s32.totalorder %v153, 127
        %v201 = vsel %vm200, %v197, %v199
        %v202 = vsel %vm200, %v199, %v197
        %v203 = vsel %vm181, %v201, -inf
        %v204 = vsel %vm182, %v202, -inf
        %v205 = vmax.f32 %v194, %v203
        %v206 = vmax.f32 %v195, %v204
        %v207 = vmax.f32 %v145, %v205
        %v208 = vmax.f32 %v151, %v206
        %209 = vrot.lane.b32.xlu0 %v207, 16
        %v210 = vpop.permute.xlu0 %209
        %211 = vrot.lane.b32.xlu0 %v208, 16
        %v212 = vpop.permute.xlu0 %211
        %vm213 = vcmp.lt.s32.totalorder %v153, 16
        %v214 = vsel %vm213, %v210, %v212
        %v215 = vsel %vm213, %v212, %v210
        %v216 = vsel %vm183, %v215, -inf
        %v217 = vsel %vm184, %v214, -inf
        %218 = vrot.lane.b32.xlu0 %v207, 112
        %v219 = vpop.permute.xlu0 %218
        %220 = vrot.lane.b32.xlu0 %v208, 112
        %v221 = vpop.permute.xlu0 %220
        %vm222 = vcmp.lt.s32.totalorder %v153, 112
        %v223 = vsel %vm222, %v219, %v221
        %v224 = vsel %vm222, %v221, %v219
        %v225 = vsel %vm185, %v223, -inf
        %v226 = vsel %vm186, %v224, -inf
        %v227 = vmax.f32 %v216, %v225
        %v228 = vmax.f32 %v217, %v226
        %v229 = vmax.f32 %v207, %v227
        %v230 = vmax.f32 %v208, %v228
        %vm231 = vcmp.eq.f32.partialorder %v229, %v145
        %vm232 = vcmp.eq.f32.partialorder %v230, %v151
        %v233 = vsel %vm231, 1, 0
        %v234 = vsel %vm232, 1, 0
        %v235 = vcvt.s32.f32 %v233
        %v236 = vcvt.s32.f32 %v234
        %v237 = vlaneseq
        %v238 = vshrl.u32 %v237, 7
        %v239 = vsub.s32 0, %v238
        %v240 = vrot.slane %v235, %v239
        %v241 = vlaneseq
        %v242 = vshrl.u32 %v241, 7
        %v243 = vsub.s32 0, %v242
        %v244 = vrot.slane %v236, %v243
        %v245 = vmul.f32 %v133, %v240
        %v246 = vmul.f32 %v134, %v244
        %247 = vst [vmem:[%s132] sm:$0xff] %v245
        %248 = vst [vmem:[%s132 + $0x8] sm:$0xff] %v246
        %s249 = sand.u32 %s52, 1
        %s250 = scalar_lea.sflag [#allocation4], %s249
        %s251 = sand.u32 %s52, 1
        %s252 = smul.addr %s251, 16
        %s253 = scalar_lea.vmem [#allocation5], %s252
        // Predicated region
        $region29: #{tpu_custom_call.1} parent=23 // pred_check
          %p254 = pneg %p62
        $region30: #{tpu_custom_call.1} parent=23 // pred_check_branch
          %256 = sbr.rel (%p254) target = $region32
        $region31: #{tpu_custom_call.1} parent=23 // pred_region
          %s258 = ssub.s32 256, 256
          %259 = vsyncadd %s250, %s258
          %s260 = smul.addr %s18, 2
          %s261 = smul.addr %s260, 128
          %s262 = scalar_lea.hbm %s1, %s261
          %s264 = sshll.u32 %s253, 4
          %s265 = int_to_ptr.vmem [resolvable:$true] %s264
          %267 = dma.vmem_to_hbm [thread:$0]  %s265, 256, %s262, %s250
        $region32: #{tpu_custom_call.1} parent=23 // pred_fallthru
          _
      $region24: #{tpu_custom_call.1} parent=5 // pred_fallthru
        _
      %p268 = scmp.le.s32.totalorder 2, %s13
      // Predicated region
      $region33: #{tpu_custom_call.1} parent=5 // pred_check
        %p269 = pneg %p268
      $region34: #{tpu_custom_call.1} parent=5 // pred_check_branch
        %271 = sbr.rel (%p269) target = $region36
      $region35: #{tpu_custom_call.1} parent=5 // pred_region
        %s272 = ssub.s32 %s13, 2
        // Predicated region
        $region37: #{tpu_custom_call.1} parent=35 // pred_check
          %p273 = pneg %p68
        $region38: #{tpu_custom_call.1} parent=35 // pred_check_branch
          %275 = sbr.rel (%p273) target = $region40
        $region39: #{tpu_custom_call.1} parent=35 // pred_region
          %s276 = sand.u32 %s53, 1
          %s277 = scalar_lea.sflag [#allocation4], %s276
          %s278 = sand.u32 %s53, 1
          %s279 = smul.addr %s278, 16
          %s280 = scalar_lea.vmem [#allocation5], %s279
          %281 = dma.done %s277, 256
        $region40: #{tpu_custom_call.1} parent=35 // pred_fallthru
          _
      $region36: #{tpu_custom_call.1} parent=5 // pred_fallthru
        _
    $region6: #{tpu_custom_call.1} parent=1 // loop_footer
      %s17 = sadd.s32 1, %s13
    $region7: #{tpu_custom_call.1} parent=1 // loop_footer_branch
      %12 = sbr.rel target = $region3
    $region8: #{tpu_custom_call.1} parent=1 // loop_exit
      _
    %282 = vsyncpa [#allocation3], 1
    %s283 = scalar_lea.sflag [#allocation3], 1
    %284 = vsyncpa %s283, 1
    %285 = vsyncpa [#allocation4], 1
    %s286 = scalar_lea.sflag [#allocation4], 1
    %287 = vsyncpa %s286, 1

</llo_original>
